<compile_context>
chip_gen: v6e
topology: v6e:2x2x1
jax: 0.10.0
libtpu: 0.0.40
codegen_flags: <defaults>
</compile_context>

<pallas_src>
import math
import functools

import jax
import jax.numpy as jnp
from jax.experimental import pallas as pl
from jax.experimental.pallas import tpu as pltpu


def _round_up(x, m):
    return -(-x // m) * m


def make_fixed_pe(max_len, d_model, scale_factor=1.0, dtype=jnp.float32):
    """Deterministic buffer init, matching the PyTorch __init__ (handles odd d_model)."""
    position = jnp.arange(max_len, dtype=jnp.float32)[:, None]                 # (max_len, 1)
    div_term = jnp.exp(
        jnp.arange(0, d_model, 2, dtype=jnp.float32) * (-math.log(10000.0) / d_model))
    pe = jnp.zeros((max_len, d_model), dtype=jnp.float32)
    pe = pe.at[:, 0::2].set(jnp.sin(position * div_term))
    pe = pe.at[:, 1::2].set(jnp.cos(position * div_term)[:, : d_model // 2])
    pe = scale_factor * pe[:, None, :]                                         # (max_len, 1, d_model)
    return pe.astype(dtype)


# ----------------------------------------------------------------------------
# Kernels
# ----------------------------------------------------------------------------

def _pe_kernel_lane(x_ref, pe_ref, o_ref, *, batch, d):
    # x_ref/o_ref: (ts, B*D) sublane/lane dense; pe_ref: (ts, D), D % 128 == 0.
    pe = pe_ref[...]
    for b in range(batch):                       # static unroll, lane-aligned slices
        sl = pl.ds(b * d, d)
        o_ref[:, sl] = (x_ref[:, sl] + pe).astype(o_ref.dtype)


def _pe_dropout_kernel_lane(x_ref, pe_ref, bits_ref, o_ref, *, batch, d, threshold, scale):
    pe = pe_ref[...]
    thr = jnp.uint32(threshold)
    for b in range(batch):
        sl = pl.ds(b * d, d)
        y = (x_ref[:, sl] + pe) * scale
        keep = bits_ref[:, sl] >= thr
        o_ref[:, sl] = jnp.where(keep, y, jnp.zeros_like(y)).astype(o_ref.dtype)


def _pe_kernel_general(x_ref, pe_ref, o_ref):
    # x_ref: (ts, B, D); pe_ref: (ts, 1, D) broadcast over batch.
    o_ref[...] = (x_ref[...] + pe_ref[...]).astype(o_ref.dtype)


def _pe_dropout_kernel_general(x_ref, pe_ref, bits_ref, o_ref, *, threshold, scale):
    thr = jnp.uint32(threshold)
    y = (x_ref[...] + pe_ref[...]) * scale
    keep = bits_ref[...] >= thr
    o_ref[...] = jnp.where(keep, y, jnp.zeros_like(y)).astype(o_ref.dtype)


# ----------------------------------------------------------------------------
# Tiling / wrapper
# ----------------------------------------------------------------------------

def _sublane_multiple(dtype):
    size = jnp.dtype(dtype).itemsize
    if size >= 4:
        return 8
    if size == 2:
        return 16
    return 32


@functools.lru_cache(maxsize=1)
def _default_vmem_budget():
    # Generation-aware: ~half of physical VMEM minus headroom (v5e/v6e: 56 MiB,
    # v7x: 24 MiB).  Falls back to 40 MiB — safe on every generation — when the
    # hardware cannot be queried (e.g. interpret mode on CPU).
    try:
        cap = int(pltpu.get_tpu_info().vmem_capacity_bytes)
        return int(min(max(cap // 2 - (8 << 20), 24 << 20), 96 << 20))
    except Exception:
        return 40 << 20


def _pick_seq_tile(seq_len, *, per_row_bytes, sub, vmem_budget):
    """Biggest seq tile whose full VMEM footprint fits the budget; >=2 grid steps
    when the sequence allows it, preferring an even step count (v7x 2-TC split)."""
    ts = max(sub, (vmem_budget // max(per_row_bytes, 1)) // sub * sub)
    if ts >= seq_len:
        if seq_len >= 2 * sub:
            return _round_up(pl.cdiv(seq_len, 2), sub)   # 2 steps -> DMA/compute overlap
        return seq_len                                   # single full-extent block
    nsteps = pl.cdiv(seq_len, ts)
    if nsteps > 1 and nsteps % 2 == 1:
        ts2 = _round_up(pl.cdiv(seq_len, nsteps + 1), sub)
        if ts2 >= sub and pl.cdiv(seq_len, ts2) % 2 == 0:
            ts = ts2
    return ts


def fixed_positional_encoding(x, pe, *, dropout_p=0.1, training=False, seed=0,
                              tile_s=None, donate_x=False,
                              min_kernel_bytes=1 << 20, vmem_budget_bytes=None):
    """y = dropout(x + pe[:seq_len]).

    x : (seq_len, batch, d_model);  pe : (max_len, 1, d_model) or (max_len, d_model).
    """
    S, B, D = x.shape
    pe2d = pe.reshape(pe.shape[0], -1)
    assert pe2d.shape[1] == D and pe.shape[0] >= S, \
        "pe must be (max_len >= seq_len, 1, d_model)"
    if pe2d.dtype != x.dtype:
        # Store pe in the model dtype at init (make_fixed_pe(dtype=...)) to make
        # this a no-op; only cast when needed.
        pe2d = pe2d.astype(x.dtype)

    if training and dropout_p >= 1.0:
        return jnp.zeros_like(x)
    apply_dropout = bool(training) and 0.0 < dropout_p < 1.0

    if apply_dropout:
        threshold = min(int(round(dropout_p * (2 ** 32))), 2 ** 32 - 1)
        scale = 1.0 / (1.0 - dropout_p)
        # Same mask for the kernel path and the XLA fallback; independent of tiling.
        bits = jax.random.bits(jax.random.PRNGKey(seed), (S, B, D), dtype=jnp.uint32)
    else:
        threshold, scale, bits = 0, 1.0, None

    dsize = jnp.dtype(x.dtype).itemsize

    # Tiny problems: pallas_call launch + per-step overhead dominates; plain XLA wins.
    if S * B * D * dsize < min_kernel_bytes:
        y = x + pe2d[:S][:, None, :]
        if apply_dropout:
            y = jnp.where(bits >= jnp.uint32(threshold), y * scale, 0.0)
        return y.astype(x.dtype)

    lane_dense = (D % 128 == 0)
    sub = _sublane_multiple(x.dtype)
    budget = vmem_budget_bytes if vmem_budget_bytes is not None else _default_vmem_budget()

    x_row = B * D * dsize
    pe_row = D * dsize
    bits_row = (B * D * 4) if apply_dropout else 0
    # VMEM per seq-row: double-buffered x-in / out / pe / bits pipeline buffers
    # plus ~3 block-sized in-kernel temporaries (sum, keep mask, scaled value).
    per_row = 2 * (2 * x_row + pe_row + bits_row) + 3 * x_row

    ts = tile_s if tile_s is not None else _pick_seq_tile(
        S, per_row_bytes=per_row, sub=sub, vmem_budget=budget)
    ts = min(ts, S)
    grid = (pl.cdiv(S, ts),)

    if lane_dense:
        # Lane/sublane-dense layout: block minor dims (ts, B*D) -> unmasked vld/vst.
        x_in = x.reshape(S, B * D)                      # contiguous -> free reshape
        inputs = [x_in, pe2d]                           # full pe; no pe[:S] HBM copy
        in_specs = [pl.BlockSpec((ts, B * D), lambda i: (i, 0)),
                    pl.BlockSpec((ts, D), lambda i: (i, 0))]
        if apply_dropout:
            inputs.append(bits.reshape(S, B * D))
            in_specs.append(pl.BlockSpec((ts, B * D), lambda i: (i, 0)))
            kernel = functools.partial(_pe_dropout_kernel_lane, batch=B, d=D,
                                       threshold=threshold, scale=scale)
        else:
            kernel = functools.partial(_pe_kernel_lane, batch=B, d=D)
        out_specs = pl.BlockSpec((ts, B * D), lambda i: (i, 0))
        out_shape = jax.ShapeDtypeStruct((S, B * D), x.dtype)
    else:
        # General layout: full-extent minor dims (B, D) are always legal.
        # TODO(synk): optionally zero-pad D to the next multiple of 128 when the
        # padding fraction is small; sub-128 lane width means masked partial stores.
        x_in = x
        pe_in = pe2d[:, None, :]
        inputs = [x_in, pe_in]
        in_specs = [pl.BlockSpec((ts, B, D), lambda i: (i, 0, 0)),
                    pl.BlockSpec((ts, 1, D), lambda i: (i, 0, 0))]
        if apply_dropout:
            inputs.append(bits)
            in_specs.append(pl.BlockSpec((ts, B, D), lambda i: (i, 0, 0)))
            kernel = functools.partial(_pe_dropout_kernel_general,
                                       threshold=threshold, scale=scale)
        else:
            kernel = _pe_kernel_general
        out_specs = pl.BlockSpec((ts, B, D), lambda i: (i, 0, 0))
        out_shape = jax.ShapeDtypeStruct((S, B, D), x.dtype)

    needed = ts * per_row                               # already counts temporaries
    vmem_limit = int(min(max(needed + (4 << 20), 16 << 20), budget + (16 << 20)))

    y = pl.pallas_call(
        kernel,
        out_shape=out_shape,
        grid=grid,
        in_specs=in_specs,
        out_specs=out_specs,
        compiler_params=pltpu.CompilerParams(
            dimension_semantics=("parallel",),          # independent tiles -> 2-TC split on v7x
            vmem_limit_bytes=vmem_limit),
        input_output_aliases=({0: 0} if donate_x else {}),
    )(*inputs)
    return y.reshape(S, B, D)


# ----------------------------------------------------------------------------
# Tests
# ----------------------------------------------------------------------------

if __name__ == "__main__":
    key = jax.random.PRNGKey(0)
    k1, k2, k3, k4 = jax.random.split(key, 4)

    # --- Case 1: lane-dense path (d_model % 128 == 0), eval mode.
    S1, B1, D1 = 256, 8, 128
    x1 = jax.random.normal(k1, (S1, B1, D1), dtype=jnp.float32)
    pe1 = make_fixed_pe(512, D1)
    out1 = jax.block_until_ready(
        fixed_positional_encoding(x1, pe1, dropout_p=0.1, training=False))
    ref1 = x1 + pe1[:S1]
    assert out1.shape == (S1, B1, D1)
    assert jnp.allclose(out1, ref1, atol=1e-5, rtol=1e-5)

    # --- Case 1b: training mode (dropout).  Mask must exactly match the host
    #     jax.random bit-stream (same for kernel path and fallback).
    p = 0.25
    seed = 1234
    out1t = jax.block_until_ready(
        fixed_positional_encoding(x1, pe1, dropout_p=p, training=True, seed=seed))
    thr = jnp.uint32(min(int(round(p * (2 ** 32))), 2 ** 32 - 1))
    bits_ref = jax.random.bits(jax.random.PRNGKey(seed), (S1, B1, D1), dtype=jnp.uint32)
    expected = jnp.where(bits_ref >= thr, ref1 * (1.0 / (1.0 - p)), 0.0)
    assert jnp.allclose(out1t, expected, atol=1e-5, rtol=1e-5)
    drop_frac = float(jnp.mean((out1t == 0.0).astype(jnp.float32)))
    assert 0.15 < drop_frac < 0.35, drop_frac

    # --- Case 2: general-layout path (d_model not a multiple of 128), eval mode.
    S2, B2, D2 = 192, 16, 96
    x2 = jax.random.normal(k2, (S2, B2, D2), dtype=jnp.float32)
    pe2 = make_fixed_pe(256, D2)
    out2 = jax.block_until_ready(
        fixed_positional_encoding(x2, pe2, dropout_p=0.1, training=False))
    assert jnp.allclose(out2, x2 + pe2[:S2], atol=1e-5, rtol=1e-5)

    # --- Case 3: bf16 lane-dense path (pe stored in model dtype -> no per-call cast).
    S3, B3, D3 = 512, 8, 128
    x3 = jax.random.normal(k3, (S3, B3, D3), dtype=jnp.float32).astype(jnp.bfloat16)
    pe3 = make_fixed_pe(1024, D3, dtype=jnp.bfloat16)
    out3 = jax.block_until_ready(
        fixed_positional_encoding(x3, pe3, dropout_p=0.1, training=False))
    ref3 = x3 + pe3[:S3]
    assert out3.dtype == jnp.bfloat16
    assert jnp.allclose(out3.astype(jnp.float32), ref3.astype(jnp.float32),
                        atol=1e-2, rtol=1e-2)

    # --- Case 4: tiny shape -> plain-XLA fallback (kernel launch would dominate).
    S4, B4, D4 = 8, 2, 32
    x4 = jax.random.normal(k4, (S4, B4, D4), dtype=jnp.float32)
    pe4 = make_fixed_pe(1024, D4)
    out4 = jax.block_until_ready(
        fixed_positional_encoding(x4, pe4, dropout_p=0.1, training=False))
    assert jnp.allclose(out4, x4 + pe4[:S4], atol=1e-6, rtol=1e-6)

    print("KERNEL_OK")
</pallas_src>

<mosaic_0001>
module attributes {stable_mosaic.version = 11 : i64} {
  func.func @_pe_kernel_lane(%arg0: i32, %arg1: memref<128x1024xf32, #tpu.memory_space<vmem>>, %arg2: memref<128x128xf32, #tpu.memory_space<vmem>>, %arg3: memref<128x1024xf32, #tpu.memory_space<vmem>>) attributes {dimension_semantics = [#tpu.dimension_semantics<parallel>], iteration_bounds = array<i64: 2>, scalar_prefetch = 0 : i64, scratch_operands = 0 : i64, tpu.core_type = #tpu.core_type<tc>, window_params = [{transform_indices = @transform_0, window_bounds = array<i64: 128, 1024>}, {transform_indices = @transform_1, window_bounds = array<i64: 128, 128>}, {transform_indices = @transform_2, window_bounds = array<i64: 128, 1024>}]} {
    %c0 = arith.constant 0 : index
    %c0_0 = arith.constant 0 : index
    %0 = vector.load %arg2[%c0, %c0_0] : memref<128x128xf32, #tpu.memory_space<vmem>>, vector<128x128xf32>
    %c0_1 = arith.constant 0 : index
    %c0_2 = arith.constant 0 : index
    %1 = vector.load %arg1[%c0_1, %c0_2] : memref<128x1024xf32, #tpu.memory_space<vmem>>, vector<128x128xf32>
    %2 = arith.addf %1, %0 : vector<128x128xf32>
    %c0_3 = arith.constant 0 : index
    %c0_4 = arith.constant 0 : index
    %3 = vector.load %arg3[%c0_3, %c0_4] : memref<128x1024xf32, #tpu.memory_space<vmem>>, vector<128x128xf32>
    tpu.vector_store %arg3[%c0_3, %c0_4], %2 {strides = array<i32>} : memref<128x1024xf32, #tpu.memory_space<vmem>>, vector<128x128xf32>,
    %c0_5 = arith.constant 0 : index
    %c128 = arith.constant 128 : index
    %4 = vector.load %arg1[%c0_5, %c128] : memref<128x1024xf32, #tpu.memory_space<vmem>>, vector<128x128xf32>
    %5 = arith.addf %4, %0 : vector<128x128xf32>
    %c0_6 = arith.constant 0 : index
    %c128_7 = arith.constant 128 : index
    %6 = vector.load %arg3[%c0_6, %c128_7] : memref<128x1024xf32, #tpu.memory_space<vmem>>, vector<128x128xf32>
    tpu.vector_store %arg3[%c0_6, %c128_7], %5 {strides = array<i32>} : memref<128x1024xf32, #tpu.memory_space<vmem>>, vector<128x128xf32>,
    %c0_8 = arith.constant 0 : index
    %c256 = arith.constant 256 : index
    %7 = vector.load %arg1[%c0_8, %c256] : memref<128x1024xf32, #tpu.memory_space<vmem>>, vector<128x128xf32>
    %8 = arith.addf %7, %0 : vector<128x128xf32>
    %c0_9 = arith.constant 0 : index
    %c256_10 = arith.constant 256 : index
    %9 = vector.load %arg3[%c0_9, %c256_10] : memref<128x1024xf32, #tpu.memory_space<vmem>>, vector<128x128xf32>
    tpu.vector_store %arg3[%c0_9, %c256_10], %8 {strides = array<i32>} : memref<128x1024xf32, #tpu.memory_space<vmem>>, vector<128x128xf32>,
    %c0_11 = arith.constant 0 : index
    %c384 = arith.constant 384 : index
    %10 = vector.load %arg1[%c0_11, %c384] : memref<128x1024xf32, #tpu.memory_space<vmem>>, vector<128x128xf32>
    %11 = arith.addf %10, %0 : vector<128x128xf32>
    %c0_12 = arith.constant 0 : index
    %c384_13 = arith.constant 384 : index
    %12 = vector.load %arg3[%c0_12, %c384_13] : memref<128x1024xf32, #tpu.memory_space<vmem>>, vector<128x128xf32>
    tpu.vector_store %arg3[%c0_12, %c384_13], %11 {strides = array<i32>} : memref<128x1024xf32, #tpu.memory_space<vmem>>, vector<128x128xf32>,
    %c0_14 = arith.constant 0 : index
    %c512 = arith.constant 512 : index
    %13 = vector.load %arg1[%c0_14, %c512] : memref<128x1024xf32, #tpu.memory_space<vmem>>, vector<128x128xf32>
    %14 = arith.addf %13, %0 : vector<128x128xf32>
    %c0_15 = arith.constant 0 : index
    %c512_16 = arith.constant 512 : index
    %15 = vector.load %arg3[%c0_15, %c512_16] : memref<128x1024xf32, #tpu.memory_space<vmem>>, vector<128x128xf32>
    tpu.vector_store %arg3[%c0_15, %c512_16], %14 {strides = array<i32>} : memref<128x1024xf32, #tpu.memory_space<vmem>>, vector<128x128xf32>,
    %c0_17 = arith.constant 0 : index
    %c640 = arith.constant 640 : index
    %16 = vector.load %arg1[%c0_17, %c640] : memref<128x1024xf32, #tpu.memory_space<vmem>>, vector<128x128xf32>
    %17 = arith.addf %16, %0 : vector<128x128xf32>
    %c0_18 = arith.constant 0 : index
    %c640_19 = arith.constant 640 : index
    %18 = vector.load %arg3[%c0_18, %c640_19] : memref<128x1024xf32, #tpu.memory_space<vmem>>, vector<128x128xf32>
    tpu.vector_store %arg3[%c0_18, %c640_19], %17 {strides = array<i32>} : memref<128x1024xf32, #tpu.memory_space<vmem>>, vector<128x128xf32>,
    %c0_20 = arith.constant 0 : index
    %c768 = arith.constant 768 : index
    %19 = vector.load %arg1[%c0_20, %c768] : memref<128x1024xf32, #tpu.memory_space<vmem>>, vector<128x128xf32>
    %20 = arith.addf %19, %0 : vector<128x128xf32>
    %c0_21 = arith.constant 0 : index
    %c768_22 = arith.constant 768 : index
    %21 = vector.load %arg3[%c0_21, %c768_22] : memref<128x1024xf32, #tpu.memory_space<vmem>>, vector<128x128xf32>
    tpu.vector_store %arg3[%c0_21, %c768_22], %20 {strides = array<i32>} : memref<128x1024xf32, #tpu.memory_space<vmem>>, vector<128x128xf32>,
    %c0_23 = arith.constant 0 : index
    %c896 = arith.constant 896 : index
    %22 = vector.load %arg1[%c0_23, %c896] : memref<128x1024xf32, #tpu.memory_space<vmem>>, vector<128x128xf32>
    %23 = arith.addf %22, %0 : vector<128x128xf32>
    %c0_24 = arith.constant 0 : index
    %c896_25 = arith.constant 896 : index
    %24 = vector.load %arg3[%c0_24, %c896_25] : memref<128x1024xf32, #tpu.memory_space<vmem>>, vector<128x128xf32>
    tpu.vector_store %arg3[%c0_24, %c896_25], %23 {strides = array<i32>} : memref<128x1024xf32, #tpu.memory_space<vmem>>, vector<128x128xf32>,
    return
  }
  func.func @transform_0(%arg0: i32) -> (i32, i32) {
    %c0_i32 = arith.constant 0 : i32
    %c0_i32_0 = arith.constant 0 : i32
    return %arg0, %c0_i32 : i32, i32
  }
  func.func @transform_1(%arg0: i32) -> (i32, i32) {
    %c0_i32 = arith.constant 0 : i32
    %c0_i32_0 = arith.constant 0 : i32
    return %arg0, %c0_i32 : i32, i32
  }
  func.func @transform_2(%arg0: i32) -> (i32, i32) {
    %c0_i32 = arith.constant 0 : i32
    %c0_i32_0 = arith.constant 0 : i32
    return %arg0, %c0_i32 : i32, i32
  }
}

</mosaic_0001>

<llo_original>
// kernel: tpu_custom_call.1
$region0: #{tpu_custom_call.1}
  #allocation0 [shape = 'u32[]', space=smem, size = 0x4, offset = 0x4, fixed_abs, tag = 'smem constant byte address 0x4 - core index']
  #allocation1 [shape = 'u32[144,128]{1,0:T(1,128)}', space=vmem, size = 0x12000, scoped, tag = 'internal scratch']
  %s0 = inlined_call_operand.hbm [shape: f32[256,1024], index: 0, kind: input, shape index: {}]
  %s1 = inlined_call_operand.hbm [shape: f32[512,128], index: 1, kind: input, shape index: {}]
  %s2 = inlined_call_operand.hbm [shape: f32[256,1024], index: 2, kind: output, shape index: {}]
  %s3 = sld [smem:[#allocation0]]
  $region49: #{tpu_custom_call.1} parent=0
    _
  %s5 = ssub.s32 1, %s3
  %s6 = scalar_select 0, %s5, %s3
  $region1: #{tpu_custom_call.1} parent=0
    #allocation2 [shape = 'u8[1048576]{0}', space=vmem, size = 0x100000, scoped, tag = 'input window, operand 0']
    #allocation3 [shape = 's32[2]{0}', space=sflag, size = 0x8, scoped, tag = 'scoped memory for tpu_custom_call.1']
    #allocation4 [shape = 's32[2]{0}', space=sflag, size = 0x8, scoped, tag = 'scoped memory for tpu_custom_call.1']
    #allocation5 [shape = 'u8[131072]{0}', space=vmem, size = 0x20000, scoped, tag = 'input window, operand 1']
    #allocation6 [shape = 's32[2]{0}', space=sflag, size = 0x8, scoped, tag = 'scoped memory for tpu_custom_call.1']
    #allocation7 [shape = 'u8[1048576]{0}', space=vmem, size = 0x100000, scoped, tag = 'output window, operand 0']
    %7 = vsyncpa [#allocation3], 0
    %s8 = scalar_lea.sflag [#allocation3], 1
    %9 = vsyncpa %s8, 0
    %10 = vsyncpa [#allocation6], 0
    %s11 = scalar_lea.sflag [#allocation6], 1
    %12 = vsyncpa %s11, 0
    %13 = vsyncpa [#allocation4], 0
    %s14 = scalar_lea.sflag [#allocation4], 1
    %15 = vsyncpa %s14, 0
    loop: start=0, step=1, limit=4
    $region2: #{tpu_custom_call.1} parent=1 // loop_pre_header
      _
    $region3: #{tpu_custom_call.1} parent=1 // loop_header
      %s17 = sphi 0, %s21
      %p18 = scmp.ge.s32.totalorder %s17, 4
      %s27 = sphi 0, %s29
      %s30 = sphi 0, %s27
      %s31 = sphi 0, %s30
      %s47 = sphi 0, %s31
      %s53 = sphi 0, %s55
      %s56 = sphi 0, %s53
      %s57 = sphi 0, %s56
      %s73 = sphi 0, %s57
      %s79 = sphi 0, %s81
      %s82 = sphi 0, %s79
      %s83 = sphi 0, %s82
      %s99 = sphi 0, %s83
    $region4: #{tpu_custom_call.1} parent=1 // loop_header_branch
      %20 = sbr.rel (%p18) target = $region8
    $region5: #{tpu_custom_call.1} parent=1 // loop_body
      %s22 = ssub.s32 %s17, 1
      %s23 = ssub.s32 %s17, 2
      %s24 = sadd.s32 %s17, 1
      %s25 = ssub.s32 %s17, %s24
      %p26 = scmp.eq.s32.totalorder %s25, 0
      %s28 = sadd.s32 %s27, 1
      %s29 = scalar_select %p26, %s27, %s28
      %p32 = pneg %p26
      %p33 = scmp.eq.s32.totalorder %s17, 1
      %p34 = por %p32, %p33
      %p35 = scmp.ne.s32.totalorder %s27, %s30
      %p36 = scmp.eq.s32.totalorder %s17, 0
      %p37 = por %p35, %p36
      %p38 = scmp.ne.s32.totalorder %s27, %s30
      %p39 = scmp.eq.s32.totalorder %s22, 1
      %p40 = por %p38, %p39
      %p41 = scmp.ne.s32.totalorder %s30, %s31
      %p42 = scmp.eq.s32.totalorder %s22, 0
      %p43 = por %p41, %p42
      %p44 = scmp.ne.s32.totalorder %s30, %s31
      %p45 = scmp.eq.s32.totalorder %s23, 1
      %p46 = por %p44, %p45
      %p48 = scmp.ne.s32.totalorder %s31, %s47
      %p49 = scmp.eq.s32.totalorder %s23, 0
      %p50 = por %p48, %p49
      %s51 = ssub.s32 %s17, %s24
      %p52 = scmp.eq.s32.totalorder %s51, 0
      %s54 = sadd.s32 %s53, 1
      %s55 = scalar_select %p52, %s53, %s54
      %p58 = pneg %p52
      %p59 = scmp.eq.s32.totalorder %s17, 1
      %p60 = por %p58, %p59
      %p61 = scmp.ne.s32.totalorder %s53, %s56
      %p62 = scmp.eq.s32.totalorder %s17, 0
      %p63 = por %p61, %p62
      %p64 = scmp.ne.s32.totalorder %s53, %s56
      %p65 = scmp.eq.s32.totalorder %s22, 1
      %p66 = por %p64, %p65
      %p67 = scmp.ne.s32.totalorder %s56, %s57
      %p68 = scmp.eq.s32.totalorder %s22, 0
      %p69 = por %p67, %p68
      %p70 = scmp.ne.s32.totalorder %s56, %s57
      %p71 = scmp.eq.s32.totalorder %s23, 1
      %p72 = por %p70, %p71
      %p74 = scmp.ne.s32.totalorder %s57, %s73
      %p75 = scmp.eq.s32.totalorder %s23, 0
      %p76 = por %p74, %p75
      %s77 = ssub.s32 %s17, %s24
      %p78 = scmp.eq.s32.totalorder %s77, 0
      %s80 = sadd.s32 %s79, 1
      %s81 = scalar_select %p78, %s79, %s80
      %p84 = pneg %p78
      %p85 = scmp.eq.s32.totalorder %s17, 1
      %p86 = por %p84, %p85
      %p87 = scmp.ne.s32.totalorder %s79, %s82
      %p88 = scmp.eq.s32.totalorder %s17, 0
      %p89 = por %p87, %p88
      %p90 = scmp.ne.s32.totalorder %s79, %s82
      %p91 = scmp.eq.s32.totalorder %s22, 1
      %p92 = por %p90, %p91
      %p93 = scmp.ne.s32.totalorder %s82, %s83
      %p94 = scmp.eq.s32.totalorder %s22, 0
      %p95 = por %p93, %p94
      %p96 = scmp.ne.s32.totalorder %s82, %s83
      %p97 = scmp.eq.s32.totalorder %s23, 1
      %p98 = por %p96, %p97
      %p100 = scmp.ne.s32.totalorder %s83, %s99
      %p101 = scmp.eq.s32.totalorder %s23, 0
      %p102 = por %p100, %p101
      %p103 = scmp.le.s32.totalorder 1, %s17
      %p104 = scmp.lt.s32.totalorder %s17, 3
      %p105 = pnand %p103, %p104
      %p106 = pneg %p105
      // Predicated region
      $region9: #{tpu_custom_call.1} parent=5 // pred_check
        _
      $region10: #{tpu_custom_call.1} parent=5 // pred_check_branch
        %108 = sbr.rel (%p105) target = $region12
      $region11: #{tpu_custom_call.1} parent=5 // pred_region
        %s109 = ssub.s32 %s17, 1
      $region12: #{tpu_custom_call.1} parent=5 // pred_fallthru
        _
      %p110 = scmp.lt.s32.totalorder %s17, 2
      // Predicated region
      $region13: #{tpu_custom_call.1} parent=5 // pred_check
        %p111 = pneg %p110
      $region14: #{tpu_custom_call.1} parent=5 // pred_check_branch
        %113 = sbr.rel (%p111) target = $region16
      $region15: #{tpu_custom_call.1} parent=5 // pred_region
        // Predicated region
        $region17: #{tpu_custom_call.1} parent=15 // pred_check
          %p114 = pneg %p37
        $region18: #{tpu_custom_call.1} parent=15 // pred_check_branch
          %116 = sbr.rel (%p114) target = $region20
        $region19: #{tpu_custom_call.1} parent=15 // pred_region
          %s117 = sand.u32 %s27, 1
          %s118 = scalar_lea.sflag [#allocation3], %s117
          %s119 = sand.u32 %s27, 1
          %s120 = smul.addr %s119, 1024
          %s121 = scalar_lea.vmem [#allocation2], %s120
          %s122 = smul.u32 16, %s17
          %s124 = ssub.s32 16384, 16384
          %125 = vsyncadd %s118, %s124
          %s126 = smul.addr %s122, 8
          %s127 = smul.addr %s126, 128
          %s128 = scalar_lea.hbm %s0, %s127
          %s129 = sshll.u32 %s121, 4
          %s130 = int_to_ptr.vmem [resolvable:$true] %s129
          %135 = dma.hbm_to_vmem [thread:$0]  %s128, 16384, %s130, %s118, 1024, 1024, 64
        $region20: #{tpu_custom_call.1} parent=15 // pred_fallthru
          _
        // Predicated region
        $region21: #{tpu_custom_call.1} parent=15 // pred_check
          %p136 = pneg %p63
        $region22: #{tpu_custom_call.1} parent=15 // pred_check_branch
          %138 = sbr.rel (%p136) target = $region24
        $region23: #{tpu_custom_call.1} parent=15 // pred_region
          %s139 = sand.u32 %s53, 1
          %s140 = scalar_lea.sflag [#allocation6], %s139
          %s141 = sand.u32 %s53, 1
          %s142 = smul.addr %s141, 128
          %s143 = scalar_lea.vmem [#allocation5], %s142
          %s144 = smul.u32 16, %s17
          %s146 = ssub.s32 2048, 2048
          %147 = vsyncadd %s140, %s146
          %s148 = smul.addr %s144, 128
          %s149 = scalar_lea.hbm %s1, %s148
          %s150 = sshll.u32 %s143, 4
          %s151 = int_to_ptr.vmem [resolvable:$true] %s150
          %156 = dma.hbm_to_vmem [thread:$0]  %s149, 2048, %s151, %s140, 128, 128, 8
        $region24: #{tpu_custom_call.1} parent=15 // pred_fallthru
          _
      $region16: #{tpu_custom_call.1} parent=5 // pred_fallthru
        _
      %p157 = scmp.le.s32.totalorder 1, %s17
      %p158 = scmp.lt.s32.totalorder %s17, 3
      %p159 = pnand %p157, %p158
      %p160 = pneg %p159
      // Predicated region
      $region25: #{tpu_custom_call.1} parent=5 // pred_check
        _
      $region26: #{tpu_custom_call.1} parent=5 // pred_check_branch
        %162 = sbr.rel (%p159) target = $region28
      $region27: #{tpu_custom_call.1} parent=5 // pred_region
        %s163 = ssub.s32 %s17, 1
        %s164 = sand.u32 %s30, 1
        %s165 = scalar_lea.sflag [#allocation3], %s164
        %s166 = sand.u32 %s30, 1
        %s167 = smul.addr %s166, 1024
        %s168 = scalar_lea.vmem [#allocation2], %s167
        // Predicated region
        $region29: #{tpu_custom_call.1} parent=27 // pred_check
          %p169 = pneg %p43
        $region30: #{tpu_custom_call.1} parent=27 // pred_check_branch
          %171 = sbr.rel (%p169) target = $region32
        $region31: #{tpu_custom_call.1} parent=27 // pred_region
          %172 = dma.done %s165, 16384
        $region32: #{tpu_custom_call.1} parent=27 // pred_fallthru
          _
        %s173 = sand.u32 %s56, 1
        %s174 = scalar_lea.sflag [#allocation6], %s173
        %s175 = sand.u32 %s56, 1
        %s176 = smul.addr %s175, 128
        %s177 = scalar_lea.vmem [#allocation5], %s176
        // Predicated region
        $region33: #{tpu_custom_call.1} parent=27 // pred_check
          %p178 = pneg %p69
        $region34: #{tpu_custom_call.1} parent=27 // pred_check_branch
          %180 = sbr.rel (%p178) target = $region36
        $region35: #{tpu_custom_call.1} parent=27 // pred_region
          %181 = dma.done %s174, 2048
        $region36: #{tpu_custom_call.1} parent=27 // pred_fallthru
          _
        %s182 = sand.u32 %s30, 1
        %s183 = scalar_lea.sflag [#allocation3], %s182
        %s184 = sand.u32 %s30, 1
        %s185 = smul.addr %s184, 1024
        %s186 = scalar_lea.vmem [#allocation2], %s185
        %p187 = pneg %p43
        %p188 = pneg %p40
        %s189 = sand.u32 %s56, 1
        %s190 = scalar_lea.sflag [#allocation6], %s189
        %s191 = sand.u32 %s56, 1
        %s192 = smul.addr %s191, 128
        %s193 = scalar_lea.vmem [#allocation5], %s192
        %p194 = pneg %p69
        %p195 = pneg %p66
        %p196 = pneg %p95
        %p197 = pneg %p92
        %s198 = sand.u32 %s82, 1
        %s199 = scalar_lea.sflag [#allocation4], %s198
        %s200 = sand.u32 %s82, 1
        %s201 = smul.addr %s200, 1024
        %s202 = scalar_lea.vmem [#allocation7], %s201
        %s203 = smul.u32 16, %s22
        %s204 = smul.u32 16, %s22
        %s205 = smul.u32 16, %s22
        %v206 = vld [vmem:[%s177] sm:$0xff]
        %v207 = vld [vmem:[%s177 + $0x8] sm:$0xff]
        %v208 = vld [vmem:[%s177 + $0x10] sm:$0xff]
        %v209 = vld [vmem:[%s177 + $0x18] sm:$0xff]
        %v210 = vld [vmem:[%s177 + $0x20] sm:$0xff]
        %v211 = vld [vmem:[%s177 + $0x28] sm:$0xff]
        %v212 = vld [vmem:[%s177 + $0x30] sm:$0xff]
        %v213 = vld [vmem:[%s177 + $0x38] sm:$0xff]
        %v214 = vld [vmem:[%s177 + $0x40] sm:$0xff]
        %v215 = vld [vmem:[%s177 + $0x48] sm:$0xff]
        %v216 = vld [vmem:[%s177 + $0x50] sm:$0xff]
        %v217 = vld [vmem:[%s177 + $0x58] sm:$0xff]
        %v218 = vld [vmem:[%s177 + $0x60] sm:$0xff]
        %v219 = vld [vmem:[%s177 + $0x68] sm:$0xff]
        %v220 = vld [vmem:[%s177 + $0x70] sm:$0xff]
        %v221 = vld [vmem:[%s177 + $0x78] sm:$0xff]
        %v222 = vld [vmem:[%s168] sm:$0xff]
        %v223 = vld [vmem:[%s168 + $0x40] sm:$0xff]
        %v224 = vld [vmem:[%s168 + $0x80] sm:$0xff]
        %v225 = vld [vmem:[%s168 + $0xc0] sm:$0xff]
        %v226 = vld [vmem:[%s168 + $0x100] sm:$0xff]
        %v227 = vld [vmem:[%s168 + $0x140] sm:$0xff]
        %v228 = vld [vmem:[%s168 + $0x180] sm:$0xff]
        %v229 = vld [vmem:[%s168 + $0x1c0] sm:$0xff]
        %v230 = vld [vmem:[%s168 + $0x200] sm:$0xff]
        %v231 = vld [vmem:[%s168 + $0x240] sm:$0xff]
        %v232 = vld [vmem:[%s168 + $0x280] sm:$0xff]
        %v233 = vld [vmem:[%s168 + $0x2c0] sm:$0xff]
        %v234 = vld [vmem:[%s168 + $0x300] sm:$0xff]
        %v235 = vld [vmem:[%s168 + $0x340] sm:$0xff]
        %v236 = vld [vmem:[%s168 + $0x380] sm:$0xff]
        %v237 = vld [vmem:[%s168 + $0x3c0] sm:$0xff]
        %v238 = vadd.f32 %v222, %v206
        %v239 = vadd.f32 %v223, %v207
        %v240 = vadd.f32 %v224, %v208
        %v241 = vadd.f32 %v225, %v209
        %v242 = vadd.f32 %v226, %v210
        %v243 = vadd.f32 %v227, %v211
        %v244 = vadd.f32 %v228, %v212
        %v245 = vadd.f32 %v229, %v213
        %v246 = vadd.f32 %v230, %v214
        %v247 = vadd.f32 %v231, %v215
        %v248 = vadd.f32 %v232, %v216
        %v249 = vadd.f32 %v233, %v217
        %v250 = vadd.f32 %v234, %v218
        %v251 = vadd.f32 %v235, %v219
        %v252 = vadd.f32 %v236, %v220
        %v253 = vadd.f32 %v237, %v221
        %254 = vst [vmem:[%s202] sm:$0xff] %v238
        %255 = vst [vmem:[%s202 + $0x40] sm:$0xff] %v239
        %256 = vst [vmem:[%s202 + $0x80] sm:$0xff] %v240
        %257 = vst [vmem:[%s202 + $0xc0] sm:$0xff] %v241
        %258 = vst [vmem:[%s202 + $0x100] sm:$0xff] %v242
        %259 = vst [vmem:[%s202 + $0x140] sm:$0xff] %v243
        %260 = vst [vmem:[%s202 + $0x180] sm:$0xff] %v244
        %261 = vst [vmem:[%s202 + $0x1c0] sm:$0xff] %v245
        %262 = vst [vmem:[%s202 + $0x200] sm:$0xff] %v246
        %263 = vst [vmem:[%s202 + $0x240] sm:$0xff] %v247
        %264 = vst [vmem:[%s202 + $0x280] sm:$0xff] %v248
        %265 = vst [vmem:[%s202 + $0x2c0] sm:$0xff] %v249
        %266 = vst [vmem:[%s202 + $0x300] sm:$0xff] %v250
        %267 = vst [vmem:[%s202 + $0x340] sm:$0xff] %v251
        %268 = vst [vmem:[%s202 + $0x380] sm:$0xff] %v252
        %269 = vst [vmem:[%s202 + $0x3c0] sm:$0xff] %v253
        %v270 = vld [vmem:[%s168 + $0x8] sm:$0xff]
        %v271 = vld [vmem:[%s168 + $0x48] sm:$0xff]
        %v272 = vld [vmem:[%s168 + $0x88] sm:$0xff]
        %v273 = vld [vmem:[%s168 + $0xc8] sm:$0xff]
        %v274 = vld [vmem:[%s168 + $0x108] sm:$0xff]
        %v275 = vld [vmem:[%s168 + $0x148] sm:$0xff]
        %v276 = vld [vmem:[%s168 + $0x188] sm:$0xff]
        %v277 = vld [vmem:[%s168 + $0x1c8] sm:$0xff]
        %v278 = vld [vmem:[%s168 + $0x208] sm:$0xff]
        %v279 = vld [vmem:[%s168 + $0x248] sm:$0xff]
        %v280 = vld [vmem:[%s168 + $0x288] sm:$0xff]
        %v281 = vld [vmem:[%s168 + $0x2c8] sm:$0xff]
        %v282 = vld [vmem:[%s168 + $0x308] sm:$0xff]
        %v283 = vld [vmem:[%s168 + $0x348] sm:$0xff]
        %v284 = vld [vmem:[%s168 + $0x388] sm:$0xff]
        %v285 = vld [vmem:[%s168 + $0x3c8] sm:$0xff]
        %v286 = vadd.f32 %v270, %v206
        %v287 = vadd.f32 %v271, %v207
        %v288 = vadd.f32 %v272, %v208
        %v289 = vadd.f32 %v273, %v209
        %v290 = vadd.f32 %v274, %v210
        %v291 = vadd.f32 %v275, %v211
        %v292 = vadd.f32 %v276, %v212
        %v293 = vadd.f32 %v277, %v213
        %v294 = vadd.f32 %v278, %v214
        %v295 = vadd.f32 %v279, %v215
        %v296 = vadd.f32 %v280, %v216
        %v297 = vadd.f32 %v281, %v217
        %v298 = vadd.f32 %v282, %v218
        %v299 = vadd.f32 %v283, %v219
        %v300 = vadd.f32 %v284, %v220
        %v301 = vadd.f32 %v285, %v221
        %302 = vst [vmem:[%s202 + $0x8] sm:$0xff] %v286
        %303 = vst [vmem:[%s202 + $0x48] sm:$0xff] %v287
        %304 = vst [vmem:[%s202 + $0x88] sm:$0xff] %v288
        %305 = vst [vmem:[%s202 + $0xc8] sm:$0xff] %v289
        %306 = vst [vmem:[%s202 + $0x108] sm:$0xff] %v290
        %307 = vst [vmem:[%s202 + $0x148] sm:$0xff] %v291
        %308 = vst [vmem:[%s202 + $0x188] sm:$0xff] %v292
        %309 = vst [vmem:[%s202 + $0x1c8] sm:$0xff] %v293
        %310 = vst [vmem:[%s202 + $0x208] sm:$0xff] %v294
        %311 = vst [vmem:[%s202 + $0x248] sm:$0xff] %v295
        %312 = vst [vmem:[%s202 + $0x288] sm:$0xff] %v296
        %313 = vst [vmem:[%s202 + $0x2c8] sm:$0xff] %v297
        %314 = vst [vmem:[%s202 + $0x308] sm:$0xff] %v298
        %315 = vst [vmem:[%s202 + $0x348] sm:$0xff] %v299
        %316 = vst [vmem:[%s202 + $0x388] sm:$0xff] %v300
        %317 = vst [vmem:[%s202 + $0x3c8] sm:$0xff] %v301
        %v318 = vld [vmem:[%s168 + $0x10] sm:$0xff]
        %v319 = vld [vmem:[%s168 + $0x50] sm:$0xff]
        %v320 = vld [vmem:[%s168 + $0x90] sm:$0xff]
        %v321 = vld [vmem:[%s168 + $0xd0] sm:$0xff]
        %v322 = vld [vmem:[%s168 + $0x110] sm:$0xff]
        %v323 = vld [vmem:[%s168 + $0x150] sm:$0xff]
        %v324 = vld [vmem:[%s168 + $0x190] sm:$0xff]
        %v325 = vld [vmem:[%s168 + $0x1d0] sm:$0xff]
        %v326 = vld [vmem:[%s168 + $0x210] sm:$0xff]
        %v327 = vld [vmem:[%s168 + $0x250] sm:$0xff]
        %v328 = vld [vmem:[%s168 + $0x290] sm:$0xff]
        %v329 = vld [vmem:[%s168 + $0x2d0] sm:$0xff]
        %v330 = vld [vmem:[%s168 + $0x310] sm:$0xff]
        %v331 = vld [vmem:[%s168 + $0x350] sm:$0xff]
        %v332 = vld [vmem:[%s168 + $0x390] sm:$0xff]
        %v333 = vld [vmem:[%s168 + $0x3d0] sm:$0xff]
        %v334 = vadd.f32 %v318, %v206
        %v335 = vadd.f32 %v319, %v207
        %v336 = vadd.f32 %v320, %v208
        %v337 = vadd.f32 %v321, %v209
        %v338 = vadd.f32 %v322, %v210
        %v339 = vadd.f32 %v323, %v211
        %v340 = vadd.f32 %v324, %v212
        %v341 = vadd.f32 %v325, %v213
        %v342 = vadd.f32 %v326, %v214
        %v343 = vadd.f32 %v327, %v215
        %v344 = vadd.f32 %v328, %v216
        %v345 = vadd.f32 %v329, %v217
        %v346 = vadd.f32 %v330, %v218
        %v347 = vadd.f32 %v331, %v219
        %v348 = vadd.f32 %v332, %v220
        %v349 = vadd.f32 %v333, %v221
        %350 = vst [vmem:[%s202 + $0x10] sm:$0xff] %v334
        %351 = vst [vmem:[%s202 + $0x50] sm:$0xff] %v335
        %352 = vst [vmem:[%s202 + $0x90] sm:$0xff] %v336
        %353 = vst [vmem:[%s202 + $0xd0] sm:$0xff] %v337
        %354 = vst [vmem:[%s202 + $0x110] sm:$0xff] %v338
        %355 = vst [vmem:[%s202 + $0x150] sm:$0xff] %v339
        %356 = vst [vmem:[%s202 + $0x190] sm:$0xff] %v340
        %357 = vst [vmem:[%s202 + $0x1d0] sm:$0xff] %v341
        %358 = vst [vmem:[%s202 + $0x210] sm:$0xff] %v342
        %359 = vst [vmem:[%s202 + $0x250] sm:$0xff] %v343
        %360 = vst [vmem:[%s202 + $0x290] sm:$0xff] %v344
        %361 = vst [vmem:[%s202 + $0x2d0] sm:$0xff] %v345
        %362 = vst [vmem:[%s202 + $0x310] sm:$0xff] %v346
        %363 = vst [vmem:[%s202 + $0x350] sm:$0xff] %v347
        %364 = vst [vmem:[%s202 + $0x390] sm:$0xff] %v348
        %365 = vst [vmem:[%s202 + $0x3d0] sm:$0xff] %v349
        %v366 = vld [vmem:[%s168 + $0x18] sm:$0xff]
        %v367 = vld [vmem:[%s168 + $0x58] sm:$0xff]
        %v368 = vld [vmem:[%s168 + $0x98] sm:$0xff]
        %v369 = vld [vmem:[%s168 + $0xd8] sm:$0xff]
        %v370 = vld [vmem:[%s168 + $0x118] sm:$0xff]
        %v371 = vld [vmem:[%s168 + $0x158] sm:$0xff]
        %v372 = vld [vmem:[%s168 + $0x198] sm:$0xff]
        %v373 = vld [vmem:[%s168 + $0x1d8] sm:$0xff]
        %v374 = vld [vmem:[%s168 + $0x218] sm:$0xff]
        %v375 = vld [vmem:[%s168 + $0x258] sm:$0xff]
        %v376 = vld [vmem:[%s168 + $0x298] sm:$0xff]
        %v377 = vld [vmem:[%s168 + $0x2d8] sm:$0xff]
        %v378 = vld [vmem:[%s168 + $0x318] sm:$0xff]
        %v379 = vld [vmem:[%s168 + $0x358] sm:$0xff]
        %v380 = vld [vmem:[%s168 + $0x398] sm:$0xff]
        %v381 = vld [vmem:[%s168 + $0x3d8] sm:$0xff]
        %v382 = vadd.f32 %v366, %v206
        %v383 = vadd.f32 %v367, %v207
        %v384 = vadd.f32 %v368, %v208
        %v385 = vadd.f32 %v369, %v209
        %v386 = vadd.f32 %v370, %v210
        %v387 = vadd.f32 %v371, %v211
        %v388 = vadd.f32 %v372, %v212
        %v389 = vadd.f32 %v373, %v213
        %v390 = vadd.f32 %v374, %v214
        %v391 = vadd.f32 %v375, %v215
        %v392 = vadd.f32 %v376, %v216
        %v393 = vadd.f32 %v377, %v217
        %v394 = vadd.f32 %v378, %v218
        %v395 = vadd.f32 %v379, %v219
        %v396 = vadd.f32 %v380, %v220
        %v397 = vadd.f32 %v381, %v221
        %398 = vst [vmem:[%s202 + $0x18] sm:$0xff] %v382
        %399 = vst [vmem:[%s202 + $0x58] sm:$0xff] %v383
        %400 = vst [vmem:[%s202 + $0x98] sm:$0xff] %v384
        %401 = vst [vmem:[%s202 + $0xd8] sm:$0xff] %v385
        %402 = vst [vmem:[%s202 + $0x118] sm:$0xff] %v386
        %403 = vst [vmem:[%s202 + $0x158] sm:$0xff] %v387
        %404 = vst [vmem:[%s202 + $0x198] sm:$0xff] %v388
        %405 = vst [vmem:[%s202 + $0x1d8] sm:$0xff] %v389
        %406 = vst [vmem:[%s202 + $0x218] sm:$0xff] %v390
        %407 = vst [vmem:[%s202 + $0x258] sm:$0xff] %v391
        %408 = vst [vmem:[%s202 + $0x298] sm:$0xff] %v392
        %409 = vst [vmem:[%s202 + $0x2d8] sm:$0xff] %v393
        %410 = vst [vmem:[%s202 + $0x318] sm:$0xff] %v394
        %411 = vst [vmem:[%s202 + $0x358] sm:$0xff] %v395
        %412 = vst [vmem:[%s202 + $0x398] sm:$0xff] %v396
        %413 = vst [vmem:[%s202 + $0x3d8] sm:$0xff] %v397
        %v414 = vld [vmem:[%s168 + $0x20] sm:$0xff]
        %v415 = vld [vmem:[%s168 + $0x60] sm:$0xff]
        %v416 = vld [vmem:[%s168 + $0xa0] sm:$0xff]
        %v417 = vld [vmem:[%s168 + $0xe0] sm:$0xff]
        %v418 = vld [vmem:[%s168 + $0x120] sm:$0xff]
        %v419 = vld [vmem:[%s168 + $0x160] sm:$0xff]
        %v420 = vld [vmem:[%s168 + $0x1a0] sm:$0xff]
        %v421 = vld [vmem:[%s168 + $0x1e0] sm:$0xff]
        %v422 = vld [vmem:[%s168 + $0x220] sm:$0xff]
        %v423 = vld [vmem:[%s168 + $0x260] sm:$0xff]
        %v424 = vld [vmem:[%s168 + $0x2a0] sm:$0xff]
        %v425 = vld [vmem:[%s168 + $0x2e0] sm:$0xff]
        %v426 = vld [vmem:[%s168 + $0x320] sm:$0xff]
        %v427 = vld [vmem:[%s168 + $0x360] sm:$0xff]
        %v428 = vld [vmem:[%s168 + $0x3a0] sm:$0xff]
        %v429 = vld [vmem:[%s168 + $0x3e0] sm:$0xff]
        %v430 = vadd.f32 %v414, %v206
        %v431 = vadd.f32 %v415, %v207
        %v432 = vadd.f32 %v416, %v208
        %v433 = vadd.f32 %v417, %v209
        %v434 = vadd.f32 %v418, %v210
        %v435 = vadd.f32 %v419, %v211
        %v436 = vadd.f32 %v420, %v212
        %v437 = vadd.f32 %v421, %v213
        %v438 = vadd.f32 %v422, %v214
        %v439 = vadd.f32 %v423, %v215
        %v440 = vadd.f32 %v424, %v216
        %v441 = vadd.f32 %v425, %v217
        %v442 = vadd.f32 %v426, %v218
        %v443 = vadd.f32 %v427, %v219
        %v444 = vadd.f32 %v428, %v220
        %v445 = vadd.f32 %v429, %v221
        %446 = vst [vmem:[%s202 + $0x20] sm:$0xff] %v430
        %447 = vst [vmem:[%s202 + $0x60] sm:$0xff] %v431
        %448 = vst [vmem:[%s202 + $0xa0] sm:$0xff] %v432
        %449 = vst [vmem:[%s202 + $0xe0] sm:$0xff] %v433
        %450 = vst [vmem:[%s202 + $0x120] sm:$0xff] %v434
        %451 = vst [vmem:[%s202 + $0x160] sm:$0xff] %v435
        %452 = vst [vmem:[%s202 + $0x1a0] sm:$0xff] %v436
        %453 = vst [vmem:[%s202 + $0x1e0] sm:$0xff] %v437
        %454 = vst [vmem:[%s202 + $0x220] sm:$0xff] %v438
        %455 = vst [vmem:[%s202 + $0x260] sm:$0xff] %v439
        %456 = vst [vmem:[%s202 + $0x2a0] sm:$0xff] %v440
        %457 = vst [vmem:[%s202 + $0x2e0] sm:$0xff] %v441
        %458 = vst [vmem:[%s202 + $0x320] sm:$0xff] %v442
        %459 = vst [vmem:[%s202 + $0x360] sm:$0xff] %v443
        %460 = vst [vmem:[%s202 + $0x3a0] sm:$0xff] %v444
        %461 = vst [vmem:[%s202 + $0x3e0] sm:$0xff] %v445
        %v462 = vld [vmem:[%s168 + $0x28] sm:$0xff]
        %v463 = vld [vmem:[%s168 + $0x68] sm:$0xff]
        %v464 = vld [vmem:[%s168 + $0xa8] sm:$0xff]
        %v465 = vld [vmem:[%s168 + $0xe8] sm:$0xff]
        %v466 = vld [vmem:[%s168 + $0x128] sm:$0xff]
        %v467 = vld [vmem:[%s168 + $0x168] sm:$0xff]
        %v468 = vld [vmem:[%s168 + $0x1a8] sm:$0xff]
        %v469 = vld [vmem:[%s168 + $0x1e8] sm:$0xff]
        %v470 = vld [vmem:[%s168 + $0x228] sm:$0xff]
        %v471 = vld [vmem:[%s168 + $0x268] sm:$0xff]
        %v472 = vld [vmem:[%s168 + $0x2a8] sm:$0xff]
        %v473 = vld [vmem:[%s168 + $0x2e8] sm:$0xff]
        %v474 = vld [vmem:[%s168 + $0x328] sm:$0xff]
        %v475 = vld [vmem:[%s168 + $0x368] sm:$0xff]
        %v476 = vld [vmem:[%s168 + $0x3a8] sm:$0xff]
        %v477 = vld [vmem:[%s168 + $0x3e8] sm:$0xff]
        %v478 = vadd.f32 %v462, %v206
        %v479 = vadd.f32 %v463, %v207
        %v480 = vadd.f32 %v464, %v208
        %v481 = vadd.f32 %v465, %v209
        %v482 = vadd.f32 %v466, %v210
        %v483 = vadd.f32 %v467, %v211
        %v484 = vadd.f32 %v468, %v212
        %v485 = vadd.f32 %v469, %v213
        %v486 = vadd.f32 %v470, %v214
        %v487 = vadd.f32 %v471, %v215
        %v488 = vadd.f32 %v472, %v216
        %v489 = vadd.f32 %v473, %v217
        %v490 = vadd.f32 %v474, %v218
        %v491 = vadd.f32 %v475, %v219
        %v492 = vadd.f32 %v476, %v220
        %v493 = vadd.f32 %v477, %v221
        %494 = vst [vmem:[%s202 + $0x28] sm:$0xff] %v478
        %495 = vst [vmem:[%s202 + $0x68] sm:$0xff] %v479
        %496 = vst [vmem:[%s202 + $0xa8] sm:$0xff] %v480
        %497 = vst [vmem:[%s202 + $0xe8] sm:$0xff] %v481
        %498 = vst [vmem:[%s202 + $0x128] sm:$0xff] %v482
        %499 = vst [vmem:[%s202 + $0x168] sm:$0xff] %v483
        %500 = vst [vmem:[%s202 + $0x1a8] sm:$0xff] %v484
        %501 = vst [vmem:[%s202 + $0x1e8] sm:$0xff] %v485
        %502 = vst [vmem:[%s202 + $0x228] sm:$0xff] %v486
        %503 = vst [vmem:[%s202 + $0x268] sm:$0xff] %v487
        %504 = vst [vmem:[%s202 + $0x2a8] sm:$0xff] %v488
        %505 = vst [vmem:[%s202 + $0x2e8] sm:$0xff] %v489
        %506 = vst [vmem:[%s202 + $0x328] sm:$0xff] %v490
        %507 = vst [vmem:[%s202 + $0x368] sm:$0xff] %v491
        %508 = vst [vmem:[%s202 + $0x3a8] sm:$0xff] %v492
        %509 = vst [vmem:[%s202 + $0x3e8] sm:$0xff] %v493
        %v510 = vld [vmem:[%s168 + $0x30] sm:$0xff]
        %v511 = vld [vmem:[%s168 + $0x70] sm:$0xff]
        %v512 = vld [vmem:[%s168 + $0xb0] sm:$0xff]
        %v513 = vld [vmem:[%s168 + $0xf0] sm:$0xff]
        %v514 = vld [vmem:[%s168 + $0x130] sm:$0xff]
        %v515 = vld [vmem:[%s168 + $0x170] sm:$0xff]
        %v516 = vld [vmem:[%s168 + $0x1b0] sm:$0xff]
        %v517 = vld [vmem:[%s168 + $0x1f0] sm:$0xff]
        %v518 = vld [vmem:[%s168 + $0x230] sm:$0xff]
        %v519 = vld [vmem:[%s168 + $0x270] sm:$0xff]
        %v520 = vld [vmem:[%s168 + $0x2b0] sm:$0xff]
        %v521 = vld [vmem:[%s168 + $0x2f0] sm:$0xff]
        %v522 = vld [vmem:[%s168 + $0x330] sm:$0xff]
        %v523 = vld [vmem:[%s168 + $0x370] sm:$0xff]
        %v524 = vld [vmem:[%s168 + $0x3b0] sm:$0xff]
        %v525 = vld [vmem:[%s168 + $0x3f0] sm:$0xff]
        %v526 = vadd.f32 %v510, %v206
        %v527 = vadd.f32 %v511, %v207
        %v528 = vadd.f32 %v512, %v208
        %v529 = vadd.f32 %v513, %v209
        %v530 = vadd.f32 %v514, %v210
        %v531 = vadd.f32 %v515, %v211
        %v532 = vadd.f32 %v516, %v212
        %v533 = vadd.f32 %v517, %v213
        %v534 = vadd.f32 %v518, %v214
        %v535 = vadd.f32 %v519, %v215
        %v536 = vadd.f32 %v520, %v216
        %v537 = vadd.f32 %v521, %v217
        %v538 = vadd.f32 %v522, %v218
        %v539 = vadd.f32 %v523, %v219
        %v540 = vadd.f32 %v524, %v220
        %v541 = vadd.f32 %v525, %v221
        %542 = vst [vmem:[%s202 + $0x30] sm:$0xff] %v526
        %543 = vst [vmem:[%s202 + $0x70] sm:$0xff] %v527
        %544 = vst [vmem:[%s202 + $0xb0] sm:$0xff] %v528
        %545 = vst [vmem:[%s202 + $0xf0] sm:$0xff] %v529
        %546 = vst [vmem:[%s202 + $0x130] sm:$0xff] %v530
        %547 = vst [vmem:[%s202 + $0x170] sm:$0xff] %v531
        %548 = vst [vmem:[%s202 + $0x1b0] sm:$0xff] %v532
        %549 = vst [vmem:[%s202 + $0x1f0] sm:$0xff] %v533
        %550 = vst [vmem:[%s202 + $0x230] sm:$0xff] %v534
        %551 = vst [vmem:[%s202 + $0x270] sm:$0xff] %v535
        %552 = vst [vmem:[%s202 + $0x2b0] sm:$0xff] %v536
        %553 = vst [vmem:[%s202 + $0x2f0] sm:$0xff] %v537
        %554 = vst [vmem:[%s202 + $0x330] sm:$0xff] %v538
        %555 = vst [vmem:[%s202 + $0x370] sm:$0xff] %v539
        %556 = vst [vmem:[%s202 + $0x3b0] sm:$0xff] %v540
        %557 = vst [vmem:[%s202 + $0x3f0] sm:$0xff] %v541
        %v558 = vld [vmem:[%s168 + $0x38] sm:$0xff]
        %v559 = vld [vmem:[%s168 + $0x78] sm:$0xff]
        %v560 = vld [vmem:[%s168 + $0xb8] sm:$0xff]
        %v561 = vld [vmem:[%s168 + $0xf8] sm:$0xff]
        %v562 = vld [vmem:[%s168 + $0x138] sm:$0xff]
        %v563 = vld [vmem:[%s168 + $0x178] sm:$0xff]
        %v564 = vld [vmem:[%s168 + $0x1b8] sm:$0xff]
        %v565 = vld [vmem:[%s168 + $0x1f8] sm:$0xff]
        %v566 = vld [vmem:[%s168 + $0x238] sm:$0xff]
        %v567 = vld [vmem:[%s168 + $0x278] sm:$0xff]
        %v568 = vld [vmem:[%s168 + $0x2b8] sm:$0xff]
        %v569 = vld [vmem:[%s168 + $0x2f8] sm:$0xff]
        %v570 = vld [vmem:[%s168 + $0x338] sm:$0xff]
        %v571 = vld [vmem:[%s168 + $0x378] sm:$0xff]
        %v572 = vld [vmem:[%s168 + $0x3b8] sm:$0xff]
        %v573 = vld [vmem:[%s168 + $0x3f8] sm:$0xff]
        %v574 = vadd.f32 %v558, %v206
        %v575 = vadd.f32 %v559, %v207
        %v576 = vadd.f32 %v560, %v208
        %v577 = vadd.f32 %v561, %v209
        %v578 = vadd.f32 %v562, %v210
        %v579 = vadd.f32 %v563, %v211
        %v580 = vadd.f32 %v564, %v212
        %v581 = vadd.f32 %v565, %v213
        %v582 = vadd.f32 %v566, %v214
        %v583 = vadd.f32 %v567, %v215
        %v584 = vadd.f32 %v568, %v216
        %v585 = vadd.f32 %v569, %v217
        %v586 = vadd.f32 %v570, %v218
        %v587 = vadd.f32 %v571, %v219
        %v588 = vadd.f32 %v572, %v220
        %v589 = vadd.f32 %v573, %v221
        %590 = vst [vmem:[%s202 + $0x38] sm:$0xff] %v574
        %591 = vst [vmem:[%s202 + $0x78] sm:$0xff] %v575
        %592 = vst [vmem:[%s202 + $0xb8] sm:$0xff] %v576
        %593 = vst [vmem:[%s202 + $0xf8] sm:$0xff] %v577
        %594 = vst [vmem:[%s202 + $0x138] sm:$0xff] %v578
        %595 = vst [vmem:[%s202 + $0x178] sm:$0xff] %v579
        %596 = vst [vmem:[%s202 + $0x1b8] sm:$0xff] %v580
        %597 = vst [vmem:[%s202 + $0x1f8] sm:$0xff] %v581
        %598 = vst [vmem:[%s202 + $0x238] sm:$0xff] %v582
        %599 = vst [vmem:[%s202 + $0x278] sm:$0xff] %v583
        %600 = vst [vmem:[%s202 + $0x2b8] sm:$0xff] %v584
        %601 = vst [vmem:[%s202 + $0x2f8] sm:$0xff] %v585
        %602 = vst [vmem:[%s202 + $0x338] sm:$0xff] %v586
        %603 = vst [vmem:[%s202 + $0x378] sm:$0xff] %v587
        %604 = vst [vmem:[%s202 + $0x3b8] sm:$0xff] %v588
        %605 = vst [vmem:[%s202 + $0x3f8] sm:$0xff] %v589
        %s606 = sand.u32 %s82, 1
        %s607 = scalar_lea.sflag [#allocation4], %s606
        %s608 = sand.u32 %s82, 1
        %s609 = smul.addr %s608, 1024
        %s610 = scalar_lea.vmem [#allocation7], %s609
        // Predicated region
        $region37: #{tpu_custom_call.1} parent=27 // pred_check
          %p611 = pneg %p92
        $region38: #{tpu_custom_call.1} parent=27 // pred_check_branch
          %613 = sbr.rel (%p611) target = $region40
        $region39: #{tpu_custom_call.1} parent=27 // pred_region
          %s614 = smul.u32 16, %s22
          %s616 = ssub.s32 16384, 16384
          %617 = vsyncadd %s607, %s616
          %s618 = smul.addr %s614, 8
          %s619 = smul.addr %s618, 128
          %s620 = scalar_lea.hbm %s2, %s619
          %s621 = sshll.u32 %s610, 4
          %s622 = int_to_ptr.vmem [resolvable:$true] %s621
          %627 = dma.vmem_to_hbm [thread:$0]  %s622, 16384, %s620, %s607, 1024, 1024, 64
        $region40: #{tpu_custom_call.1} parent=27 // pred_fallthru
          _
      $region28: #{tpu_custom_call.1} parent=5 // pred_fallthru
        _
      %p628 = scmp.le.s32.totalorder 2, %s17
      // Predicated region
      $region41: #{tpu_custom_call.1} parent=5 // pred_check
        %p629 = pneg %p628
      $region42: #{tpu_custom_call.1} parent=5 // pred_check_branch
        %631 = sbr.rel (%p629) target = $region44
      $region43: #{tpu_custom_call.1} parent=5 // pred_region
        %s632 = ssub.s32 %s17, 2
        // Predicated region
        $region45: #{tpu_custom_call.1} parent=43 // pred_check
          %p633 = pneg %p98
        $region46: #{tpu_custom_call.1} parent=43 // pred_check_branch
          %635 = sbr.rel (%p633) target = $region48
        $region47: #{tpu_custom_call.1} parent=43 // pred_region
          %s636 = sand.u32 %s83, 1
          %s637 = scalar_lea.sflag [#allocation4], %s636
          %s638 = sand.u32 %s83, 1
          %s639 = smul.addr %s638, 1024
          %s640 = scalar_lea.vmem [#allocation7], %s639
          %641 = dma.done %s637, 16384
        $region48: #{tpu_custom_call.1} parent=43 // pred_fallthru
          _
      $region44: #{tpu_custom_call.1} parent=5 // pred_fallthru
        _
    $region6: #{tpu_custom_call.1} parent=1 // loop_footer
      %s21 = sadd.s32 1, %s17
    $region7: #{tpu_custom_call.1} parent=1 // loop_footer_branch
      %16 = sbr.rel target = $region3
    $region8: #{tpu_custom_call.1} parent=1 // loop_exit
      _
    %642 = vsyncpa [#allocation3], 1
    %s643 = scalar_lea.sflag [#allocation3], 1
    %644 = vsyncpa %s643, 1
    %645 = vsyncpa [#allocation6], 1
    %s646 = scalar_lea.sflag [#allocation6], 1
    %647 = vsyncpa %s646, 1
    %648 = vsyncpa [#allocation4], 1
    %s649 = scalar_lea.sflag [#allocation4], 1
    %650 = vsyncpa %s649, 1

</llo_original>
